<compile_context>
chip_gen: v5e
topology: v5e:2x2
jax: 0.10.0
libtpu: 0.0.40
codegen_flags: <defaults>
</compile_context>

<pallas_src>
import functools
from typing import NamedTuple

import jax
import jax.numpy as jnp
from jax.experimental import pallas as pl
from jax.experimental.pallas import tpu as pltpu


# ---------------------------------------------------------------------------
# Kernel
# ---------------------------------------------------------------------------
def mlp2_kernel(x_ref, w1_ref, b1_ref, w2_ref, b2_ref, o_ref, acc_ref):
    """One (batch-tile, hidden-tile) step of relu(relu(x@W1+b1)@W2+b2).

    Grid = (batch tiles, hidden tiles).  The hidden axis is a reduction into
    the (TB, C) f32 accumulator scratch (the output BlockSpec is constant over
    it); bias-add + ReLU always happen in f32.
    """
    h_idx = pl.program_id(1)

    @pl.when(h_idx == 0)
    def _():
        acc_ref[...] = jnp.zeros_like(acc_ref)

    # Cast x per-tile to the MXU input dtype (no-op for f32 params, cheap VPU
    # cast for bf16 params) instead of paying a wrapper-side HBM pass.
    x = x_ref[...].astype(w1_ref.dtype)

    # First linear (this hidden tile) + bias + ReLU, in f32.
    h = jnp.dot(x, w1_ref[...], preferred_element_type=jnp.float32)
    h = jnp.maximum(h + b1_ref[...], 0.0)          # b1 tile is (1, TH) f32

    # Second linear: this hidden tile's contribution to all classes.
    acc_ref[...] += jnp.dot(h.astype(w2_ref.dtype), w2_ref[...],
                            preferred_element_type=jnp.float32)

    @pl.when(h_idx == pl.num_programs(1) - 1)
    def _():
        o_ref[...] = jnp.maximum(acc_ref[...] + b2_ref[...], 0.0).astype(o_ref.dtype)


# ---------------------------------------------------------------------------
# Parameter preparation (one-time padding / casting, outside the call path)
# ---------------------------------------------------------------------------
def _round_up(n, m):
    return ((n + m - 1) // m) * m


def _pad2d(a, rows, cols, dtype):
    r, c = a.shape
    a = a.astype(dtype)
    if r == rows and c == cols:
        return a
    return jnp.zeros((rows, cols), dtype).at[:r, :c].set(a)


class MLP2Params(NamedTuple):
    w1: jax.Array          # (K, H) lane-padded, MXU input dtype
    b1: jax.Array          # (1, H) f32
    w2: jax.Array          # (H, C) lane-padded, MXU input dtype
    b2: jax.Array          # (1, C) f32
    num_input: int
    num_hidden: int
    num_class: int


@functools.lru_cache(maxsize=None)
def _chip_info():
    """Best-effort chip detection -> (tag, per-core VMEM capacity bytes, multi_tc)."""
    kind = ""
    try:
        kind = jax.devices()[0].device_kind.lower()
    except Exception:
        pass
    if "v5e" in kind or "v5 lite" in kind or "v5lite" in kind:
        tag, cap, multi = "v5e", 128 * 1024 * 1024, False
    elif "v6" in kind:
        tag, cap, multi = "v6e", 128 * 1024 * 1024, False
    elif "v7" in kind:
        tag, cap, multi = "v7x", 64 * 1024 * 1024, True   # 64 MiB per TensorCore
    else:
        tag, cap, multi = "other", 64 * 1024 * 1024, False
    try:
        cap = int(pltpu.get_tpu_info().vmem_capacity_bytes)
    except Exception:
        pass
    return tag, cap, multi


def prepare_mlp2_params(w1, b1, w2, b2, *, param_dtype=None):
    """Pad every lane axis to a multiple of 128 and cast ONCE, at init time.

    w1: [num_input, num_hidden], w2: [num_hidden, num_class] (transposed vs.
    torch.nn.Linear.weight).  Zero-padded b1 entries and zero-padded W2 rows
    guarantee padded hidden units contribute exactly 0 after the ReLUs.
    param_dtype=None auto-selects bf16 on v5e (no fast f32 MXU path), f32
    elsewhere; accumulation is always f32 in the kernel.
    """
    if param_dtype is None:
        tag, _, _ = _chip_info()
        param_dtype = jnp.bfloat16 if tag == "v5e" else jnp.float32
    num_input, num_hidden = w1.shape
    num_class = w2.shape[1]
    K = _round_up(num_input, 128)
    H = _round_up(num_hidden, 128)
    C = _round_up(num_class, 128)
    w1p = _pad2d(w1, K, H, param_dtype)
    w2p = _pad2d(w2, H, C, param_dtype)
    b1p = _pad2d(jnp.reshape(b1, (1, num_hidden)), 1, H, jnp.float32)
    b2p = _pad2d(jnp.reshape(b2, (1, num_class)), 1, C, jnp.float32)
    return MLP2Params(w1p, b1p, w2p, b2p, num_input, num_hidden, num_class)


# ---------------------------------------------------------------------------
# Forward
# ---------------------------------------------------------------------------
@functools.partial(
    jax.jit, static_argnames=("num_class", "tb", "vmem_cap", "multi_tc"))
def _mlp2_forward_impl(x, w1p, b1p, w2p, b2p, *, num_class, tb, vmem_cap, multi_tc):
    B, num_input = x.shape
    K, H = w1p.shape
    C = w2p.shape[1]
    out_dtype = x.dtype

    # ---- x: only materialize a padded copy when actually required. ---------
    # If the MXU inputs are bf16, any required copy is written at half width;
    # otherwise the kernel does the (no-op) cast per tile.
    x_copy_dtype = w1p.dtype if w1p.dtype != jnp.float32 else x.dtype
    need_lane_pad = num_input != K
    need_row_pad = (B % 8) != 0
    if need_lane_pad or need_row_pad:
        Bp = _round_up(B, 8)
        xp = jnp.zeros((Bp, K), x_copy_dtype).at[:B, :num_input].set(
            x.astype(x_copy_dtype))
    else:
        Bp, xp = B, x          # zero extra HBM traffic

    x_bytes = xp.dtype.itemsize
    p_bytes = w1p.dtype.itemsize
    o_bytes = jnp.dtype(out_dtype).itemsize
    budget = int(0.75 * vmem_cap)

    # ---- batch tile: chip default, clamped to the batch and VMEM budget. ---
    TB = min(tb, _round_up(B, 8))
    while TB > 128 and (2 * TB * K * x_bytes + (2 * o_bytes + 4) * TB * C) > budget // 2:
        TB //= 2
    num_b_tiles = pl.cdiv(Bp, TB)   # partial last tile is masked by Pallas

    # ---- hidden tile: largest 128-multiple divisor of H that fits VMEM. ----
    def vmem_estimate(th):
        return (2 * TB * K * x_bytes        # x tiles (double-buffered)
                + 2 * K * th * p_bytes      # W1 tile
                + 2 * th * C * p_bytes      # W2 tile
                + 2 * 8 * th * 4            # b1 (sublane-padded)
                + 2 * 8 * C * 4             # b2
                + 2 * TB * C * o_bytes      # out tiles
                + TB * C * 4                # f32 accumulator scratch
                + TB * th * 4)              # h intermediate headroom

    if vmem_estimate(H) <= budget:
        TH = H
    else:
        m = H // 128
        best = 1
        for d in range(1, m + 1):
            if m % d == 0 and vmem_estimate(128 * d) <= budget:
                best = d
        TH = 128 * best
    num_h_tiles = H // TH
    # TODO(synk): if K alone exceeds the budget (huge num_input, esp. v7x's
    # 64 MiB/TC), add a third "arbitrary" K-reduction grid axis with a
    # (TB, TH) f32 pre-ReLU accumulator, or prepare the params in bf16.

    vmem_limit = int(min(vmem_cap, max(2 * vmem_estimate(TH) + (4 << 20), 32 << 20)))

    # Batch tiles are independent: shard across the 2 TensorCores on v7x.
    batch_sem = pltpu.PARALLEL
    if multi_tc and num_b_tiles >= 2 and num_b_tiles % 2 == 0:
        batch_sem = pltpu.CORE_PARALLEL
    dim_sems = (batch_sem, pltpu.ARBITRARY)

    out_padded = pl.pallas_call(
        mlp2_kernel,
        out_shape=jax.ShapeDtypeStruct((Bp, C), out_dtype),
        grid_spec=pltpu.PrefetchScalarGridSpec(
            num_scalar_prefetch=0,
            grid=(num_b_tiles, num_h_tiles),
            in_specs=[
                # x tile marches over batch, fixed over hidden tiles.
                # TODO(synk): if a trace shows exposed x DMA (small H), deepen
                # with pipeline_mode=pl.Buffered(3).
                pl.BlockSpec((TB, K), lambda i, h: (i, 0)),
                # Weight/bias tiles: constant over the batch axis -> stay
                # VMEM-resident between batch tiles.
                # TODO(synk): pipeline_mode=pl.Buffered(1) on these four specs
                # would drop the unused second buffer (halves resident-weight
                # VMEM, matters on v7x) once verified on the target jax.
                pl.BlockSpec((K, TH), lambda i, h: (0, h)),
                pl.BlockSpec((1, TH), lambda i, h: (0, h)),
                pl.BlockSpec((TH, C), lambda i, h: (h, 0)),
                pl.BlockSpec((1, C), lambda i, h: (0, 0)),
            ],
            out_specs=pl.BlockSpec((TB, C), lambda i, h: (i, 0)),
            scratch_shapes=[pltpu.VMEM((TB, C), jnp.float32)],
        ),
        compiler_params=pltpu.CompilerParams(
            dimension_semantics=dim_sems,
            vmem_limit_bytes=vmem_limit,
        ),
    )(xp, w1p, b1p, w2p, b2p)

    if Bp != B or C != num_class:
        return out_padded[:B, :num_class]
    return out_padded


def mlp2_forward(x, params: MLP2Params, *, tb=None):
    """y = relu(relu(x @ W1 + b1) @ W2 + b2), fused in one Pallas TPU kernel.

    `params` must come from prepare_mlp2_params() (weights already padded /
    cast, so the per-call path adds no extra HBM passes over them).
    """
    if x.shape[-1] != params.num_input:
        raise ValueError(
            f"x last dim {x.shape[-1]} != num_input {params.num_input}")
    tag, vmem_cap, multi_tc = _chip_info()
    if tb is None:
        tb = {"v5e": 128, "v6e": 512, "v7x": 256}.get(tag, 256)

    lead = x.shape[:-1]
    x2 = x if x.ndim == 2 else x.reshape((-1, x.shape[-1]))
    out = _mlp2_forward_impl(
        x2, params.w1, params.b1, params.w2, params.b2,
        num_class=params.num_class, tb=int(tb),
        vmem_cap=int(vmem_cap), multi_tc=bool(multi_tc))
    return out if x.ndim == 2 else out.reshape(lead + (params.num_class,))


# ---------------------------------------------------------------------------
# Demo / self-test
# ---------------------------------------------------------------------------
def init_mlp2_params(key, num_input, num_hidden, num_class=32, dtype=jnp.float32):
    """PyTorch nn.Linear-style init: U(-1/sqrt(fan_in), 1/sqrt(fan_in)),
       weights stored transposed relative to nn.Linear.weight."""
    k1, k2, k3, k4 = jax.random.split(key, 4)
    bound1 = 1.0 / (num_input ** 0.5)
    bound2 = 1.0 / (num_hidden ** 0.5)
    w1 = jax.random.uniform(k1, (num_input, num_hidden), dtype, -bound1, bound1)
    b1 = jax.random.uniform(k2, (1, num_hidden), dtype, -bound1, bound1)
    w2 = jax.random.uniform(k3, (num_hidden, num_class), dtype, -bound2, bound2)
    b2 = jax.random.uniform(k4, (1, num_class), dtype, -bound2, bound2)
    return w1, b1, w2, b2


if __name__ == "__main__":
    key = jax.random.PRNGKey(0)
    kx, kp = jax.random.split(key)

    batch, num_input, num_hidden, num_class = 8, 64, 32, 32
    x = jax.random.normal(kx, (batch, num_input), dtype=jnp.float32)
    w1, b1, w2, b2 = init_mlp2_params(kp, num_input, num_hidden, num_class)
    ref = jnp.maximum(jnp.maximum(x @ w1 + b1, 0.0) @ w2 + b2, 0.0)

    # f32 params (exact check). Padding/casting of the weights happens once here.
    params_f32 = prepare_mlp2_params(w1, b1, w2, b2, param_dtype=jnp.float32)
    out_f32 = jax.block_until_ready(mlp2_forward(x, params_f32))
    assert out_f32.shape == (batch, num_class)
    assert jnp.allclose(out_f32, ref, atol=1e-5, rtol=1e-5)

    # bf16 MXU-input path (f32 accumulation); loose check.
    params_bf16 = prepare_mlp2_params(w1, b1, w2, b2, param_dtype=jnp.bfloat16)
    out_bf16 = jax.block_until_ready(mlp2_forward(x, params_bf16))
    assert out_bf16.shape == (batch, num_class)
    assert jnp.allclose(out_bf16, ref, atol=5e-2, rtol=5e-2)

    # Lane-aligned case: exercises the zero-copy x path (no wrapper pad/cast).
    x2 = jax.random.normal(kx, (16, 128), dtype=jnp.float32)
    w1b, b1b, w2b, b2b = init_mlp2_params(kp, 128, 256, num_class)
    params2 = prepare_mlp2_params(w1b, b1b, w2b, b2b, param_dtype=jnp.float32)
    ref2 = jnp.maximum(jnp.maximum(x2 @ w1b + b1b, 0.0) @ w2b + b2b, 0.0)
    out2 = jax.block_until_ready(mlp2_forward(x2, params2))
    assert out2.shape == (16, num_class)
    assert jnp.allclose(out2, ref2, atol=1e-5, rtol=1e-5)

    print("KERNEL_OK")
</pallas_src>

<mosaic_0001>
module attributes {stable_mosaic.version = 11 : i64} {
  func.func @mlp2_kernel(%arg0: i32, %arg1: i32, %arg2: memref<8x128xf32, #tpu.memory_space<vmem>>, %arg3: memref<128x128xf32, #tpu.memory_space<vmem>>, %arg4: memref<1x128xf32, #tpu.memory_space<vmem>>, %arg5: memref<128x128xf32, #tpu.memory_space<vmem>>, %arg6: memref<1x128xf32, #tpu.memory_space<vmem>>, %arg7: memref<8x128xf32, #tpu.memory_space<vmem>>, %arg8: memref<8x128xf32, #tpu.memory_space<vmem>>) attributes {dimension_semantics = [#tpu.dimension_semantics<parallel>, #tpu.dimension_semantics<arbitrary>], iteration_bounds = array<i64: 1, 1>, scalar_prefetch = 0 : i64, scratch_operands = 1 : i64, tpu.core_type = #tpu.core_type<tc>, window_params = [{transform_indices = @transform_0, window_bounds = array<i64: 8, 128>}, {transform_indices = @transform_1, window_bounds = array<i64: 128, 128>}, {transform_indices = @transform_2, window_bounds = array<i64: 1, 128>}, {transform_indices = @transform_3, window_bounds = array<i64: 128, 128>}, {pipeline_mode = #tpu.pipeline_mode<synchronous>, transform_indices = @transform_4, window_bounds = array<i64: 1, 128>}, {transform_indices = @transform_5, window_bounds = array<i64: 8, 128>}]} {
    %c0_i32 = arith.constant 0 : i32
    %0 = arith.cmpi eq, %arg1, %c0_i32 : i32
    %1 = arith.extui %0 : i1 to i32
    %c0_i32_0 = arith.constant 0 : i32
    %2 = arith.cmpi ne, %1, %c0_i32_0 : i32
    scf.if %2 {
      %cst_16 = arith.constant 0.000000e+00 : f32
      %19 = vector.broadcast %cst_16 : f32 to vector<8x128xf32>
      %c0_17 = arith.constant 0 : index
      %c0_18 = arith.constant 0 : index
      %20 = vector.load %arg8[%c0_17, %c0_18] : memref<8x128xf32, #tpu.memory_space<vmem>>, vector<8x128xf32>
      tpu.vector_store %arg8[%c0_17, %c0_18], %19 {strides = array<i32>} : memref<8x128xf32, #tpu.memory_space<vmem>>, vector<8x128xf32>,
    } else {
    }
    %c0 = arith.constant 0 : index
    %c0_1 = arith.constant 0 : index
    %3 = vector.load %arg2[%c0, %c0_1] : memref<8x128xf32, #tpu.memory_space<vmem>>, vector<8x128xf32>
    %c0_2 = arith.constant 0 : index
    %c0_3 = arith.constant 0 : index
    %4 = vector.load %arg3[%c0_2, %c0_3] : memref<128x128xf32, #tpu.memory_space<vmem>>, vector<128x128xf32>
    %cst = arith.constant dense<0.000000e+00> : vector<8x128xf32>
    %5 = tpu.matmul %3, %4, %cst {dimension_numbers = #tpu.dot_dimension_numbers<[1], [0], [0], [1], [0, 0, 1, 1], [], []>} : vector<8x128xf32>, vector<128x128xf32>, vector<8x128xf32> -> vector<8x128xf32>
    %c0_4 = arith.constant 0 : index
    %c0_5 = arith.constant 0 : index
    %6 = vector.load %arg4[%c0_4, %c0_5] : memref<1x128xf32, #tpu.memory_space<vmem>>, vector<1x128xf32>
    %7 = vector.broadcast %6 : vector<1x128xf32> to vector<8x128xf32>
    %8 = arith.addf %5, %7 : vector<8x128xf32>
    %cst_6 = arith.constant 0.000000e+00 : f32
    %9 = vector.broadcast %cst_6 : f32 to vector<8x128xf32>
    %10 = arith.maximumf %8, %9 : vector<8x128xf32>
    %c0_7 = arith.constant 0 : index
    %c0_8 = arith.constant 0 : index
    %11 = vector.load %arg8[%c0_7, %c0_8] : memref<8x128xf32, #tpu.memory_space<vmem>>, vector<8x128xf32>
    %c0_9 = arith.constant 0 : index
    %c0_10 = arith.constant 0 : index
    %12 = vector.load %arg5[%c0_9, %c0_10] : memref<128x128xf32, #tpu.memory_space<vmem>>, vector<128x128xf32>
    %cst_11 = arith.constant dense<0.000000e+00> : vector<8x128xf32>
    %13 = tpu.matmul %10, %12, %cst_11 {dimension_numbers = #tpu.dot_dimension_numbers<[1], [0], [0], [1], [0, 0, 1, 1], [], []>} : vector<8x128xf32>, vector<128x128xf32>, vector<8x128xf32> -> vector<8x128xf32>
    %14 = arith.addf %11, %13 : vector<8x128xf32>
    %c0_12 = arith.constant 0 : index
    %c0_13 = arith.constant 0 : index
    %15 = vector.load %arg8[%c0_12, %c0_13] : memref<8x128xf32, #tpu.memory_space<vmem>>, vector<8x128xf32>
    tpu.vector_store %arg8[%c0_12, %c0_13], %14 {strides = array<i32>} : memref<8x128xf32, #tpu.memory_space<vmem>>, vector<8x128xf32>,
    %c0_i32_14 = arith.constant 0 : i32
    %16 = arith.cmpi eq, %arg1, %c0_i32_14 : i32
    %17 = arith.extui %16 : i1 to i32
    %c0_i32_15 = arith.constant 0 : i32
    %18 = arith.cmpi ne, %17, %c0_i32_15 : i32
    scf.if %18 {
      %c0_16 = arith.constant 0 : index
      %c0_17 = arith.constant 0 : index
      %19 = vector.load %arg8[%c0_16, %c0_17] : memref<8x128xf32, #tpu.memory_space<vmem>>, vector<8x128xf32>
      %c0_18 = arith.constant 0 : index
      %c0_19 = arith.constant 0 : index
      %20 = vector.load %arg6[%c0_18, %c0_19] : memref<1x128xf32, #tpu.memory_space<vmem>>, vector<1x128xf32>
      %21 = vector.broadcast %20 : vector<1x128xf32> to vector<8x128xf32>
      %22 = arith.addf %19, %21 : vector<8x128xf32>
      %cst_20 = arith.constant 0.000000e+00 : f32
      %23 = vector.broadcast %cst_20 : f32 to vector<8x128xf32>
      %24 = arith.maximumf %22, %23 : vector<8x128xf32>
      %c0_21 = arith.constant 0 : index
      %c0_22 = arith.constant 0 : index
      %25 = vector.load %arg7[%c0_21, %c0_22] : memref<8x128xf32, #tpu.memory_space<vmem>>, vector<8x128xf32>
      tpu.vector_store %arg7[%c0_21, %c0_22], %24 {strides = array<i32>} : memref<8x128xf32, #tpu.memory_space<vmem>>, vector<8x128xf32>,
    } else {
    }
    return
  }
  func.func @transform_0(%arg0: i32, %arg1: i32) -> (i32, i32) {
    %c0_i32 = arith.constant 0 : i32
    %c0_i32_0 = arith.constant 0 : i32
    return %arg0, %c0_i32 : i32, i32
  }
  func.func @transform_1(%arg0: i32, %arg1: i32) -> (i32, i32) {
    %c0_i32 = arith.constant 0 : i32
    %c0_i32_0 = arith.constant 0 : i32
    return %c0_i32, %arg1 : i32, i32
  }
  func.func @transform_2(%arg0: i32, %arg1: i32) -> (i32, i32) {
    %c0_i32 = arith.constant 0 : i32
    %c0_i32_0 = arith.constant 0 : i32
    return %c0_i32, %arg1 : i32, i32
  }
  func.func @transform_3(%arg0: i32, %arg1: i32) -> (i32, i32) {
    %c0_i32 = arith.constant 0 : i32
    %c0_i32_0 = arith.constant 0 : i32
    return %arg1, %c0_i32 : i32, i32
  }
  func.func @transform_4(%arg0: i32, %arg1: i32) -> (i32, i32) {
    %c0_i32 = arith.constant 0 : i32
    %c0_i32_0 = arith.constant 0 : i32
    %c0_i32_1 = arith.constant 0 : i32
    return %c0_i32, %c0_i32_0 : i32, i32
  }
  func.func @transform_5(%arg0: i32, %arg1: i32) -> (i32, i32) {
    %c0_i32 = arith.constant 0 : i32
    %c0_i32_0 = arith.constant 0 : i32
    return %arg0, %c0_i32 : i32, i32
  }
}

</mosaic_0001>

<llo_original>
// kernel: _mlp2_forward_impl.1
$region0: #{_mlp2_forward_impl.1}
  #allocation0 [shape = 'u32[]', space=smem, size = 0x4, offset = 0x4, fixed_abs, tag = 'smem constant byte address 0x4 - core index']
  #allocation1 [shape = 'u32[72,128]{1,0:T(1,128)}', space=vmem, size = 0x9000, scoped, tag = 'internal scratch']
  #allocation2 [shape = 'f32[8,128]{1,0:T(8,128)}', space=vmem, size = 0x1000, scoped, tag = 'scratch operand']
  %s0 = inlined_call_operand.vmem [shape: f32[8,128], index: 0, kind: input, shape index: {}]
  %s1 = inlined_call_operand.hbm [shape: f32[128,128], index: 1, kind: input, shape index: {}]
  %s2 = inlined_call_operand.vmem [shape: f32[1,128], index: 2, kind: input, shape index: {}]
  %s3 = inlined_call_operand.hbm [shape: f32[128,128], index: 3, kind: input, shape index: {}]
  %s4 = inlined_call_operand.vmem [shape: f32[1,128], index: 4, kind: input, shape index: {}]
  %s5 = inlined_call_operand.hbm [shape: f32[8,128], index: 5, kind: output, shape index: {}]
  %s6 = sld [smem:[#allocation0]]
  $region46: #{_mlp2_forward_impl.1} parent=0
    _
  %s8 = ssub.s32 1, %s6
  %s9 = scalar_select 0, %s8, %s6
  $region1: #{_mlp2_forward_impl.1} parent=0
    #allocation3 [shape = 'u8[65536]{0}', space=vmem, size = 0x10000, scoped, tag = 'input window, operand 1, single buffered']
    #allocation4 [shape = 's32[1]{0}', space=sflag, size = 0x4, scoped, tag = 'scoped memory for _mlp2_forward_impl.1']
    #allocation5 [shape = 's32[1]{0}', space=sflag, size = 0x4, scoped, tag = 'scoped memory for _mlp2_forward_impl.1']
    #allocation6 [shape = 'u8[65536]{0}', space=vmem, size = 0x10000, scoped, tag = 'input window, operand 3, single buffered']
    #allocation7 [shape = 's32[1]{0}', space=sflag, size = 0x4, scoped, tag = 'scoped memory for _mlp2_forward_impl.1']
    #allocation8 [shape = 'u8[4096]{0}', space=vmem, size = 0x1000, scoped, tag = 'output window, operand 0, single buffered']
    %10 = vsyncpa [#allocation4], 0
    %11 = vsyncpa [#allocation7], 0
    %12 = vsyncpa [#allocation5], 0
    // Predicated region
    $region2: #{_mlp2_forward_impl.1} parent=1 // pred_check
      _
    $region3: #{_mlp2_forward_impl.1} parent=1 // pred_check_branch
      %14 = sbr.rel (0) target = $region5
    $region4: #{_mlp2_forward_impl.1} parent=1 // pred_region
      _
    $region5: #{_mlp2_forward_impl.1} parent=1 // pred_fallthru
      _
    // Predicated region
    $region6: #{_mlp2_forward_impl.1} parent=1 // pred_check
      _
    $region7: #{_mlp2_forward_impl.1} parent=1 // pred_check_branch
      %16 = sbr.rel (0) target = $region9
    $region8: #{_mlp2_forward_impl.1} parent=1 // pred_region
      %18 = vsyncadd [#allocation4], 0
      %s19 = sshll.u32 %s1, 4
      %s20 = int_to_ptr.hbm [resolvable:$true] %s19
      %s21 = sshll.u32 [#allocation3], 4
      %s22 = int_to_ptr.vmem [resolvable:$true] %s21
      %27 = dma.hbm_to_vmem [thread:$0]  %s20, 2048, %s22, [#allocation4], 128, 128, 8
    $region9: #{_mlp2_forward_impl.1} parent=1 // pred_fallthru
      _
    // Predicated region
    $region10: #{_mlp2_forward_impl.1} parent=1 // pred_check
      _
    $region11: #{_mlp2_forward_impl.1} parent=1 // pred_check_branch
      %29 = sbr.rel (0) target = $region13
    $region12: #{_mlp2_forward_impl.1} parent=1 // pred_region
      _
    $region13: #{_mlp2_forward_impl.1} parent=1 // pred_fallthru
      _
    // Predicated region
    $region14: #{_mlp2_forward_impl.1} parent=1 // pred_check
      _
    $region15: #{_mlp2_forward_impl.1} parent=1 // pred_check_branch
      %31 = sbr.rel (0) target = $region17
    $region16: #{_mlp2_forward_impl.1} parent=1 // pred_region
      %33 = vsyncadd [#allocation7], 0
      %s34 = sshll.u32 %s3, 4
      %s35 = int_to_ptr.hbm [resolvable:$true] %s34
      %s36 = sshll.u32 [#allocation6], 4
      %s37 = int_to_ptr.vmem [resolvable:$true] %s36
      %42 = dma.hbm_to_vmem [thread:$0]  %s35, 2048, %s37, [#allocation7], 128, 128, 8
    $region17: #{_mlp2_forward_impl.1} parent=1 // pred_fallthru
      _
    // Predicated region
    $region18: #{_mlp2_forward_impl.1} parent=1 // pred_check
      _
    $region19: #{_mlp2_forward_impl.1} parent=1 // pred_check_branch
      %44 = sbr.rel (0) target = $region21
    $region20: #{_mlp2_forward_impl.1} parent=1 // pred_region
      _
    $region21: #{_mlp2_forward_impl.1} parent=1 // pred_fallthru
      _
    // Predicated region
    $region22: #{_mlp2_forward_impl.1} parent=1 // pred_check
      _
    $region23: #{_mlp2_forward_impl.1} parent=1 // pred_check_branch
      %46 = sbr.rel (0) target = $region25
    $region24: #{_mlp2_forward_impl.1} parent=1 // pred_region
      %48 = dma.done [#allocation4], 2048
    $region25: #{_mlp2_forward_impl.1} parent=1 // pred_fallthru
      _
    // Predicated region
    $region26: #{_mlp2_forward_impl.1} parent=1 // pred_check
      _
    $region27: #{_mlp2_forward_impl.1} parent=1 // pred_check_branch
      %50 = sbr.rel (0) target = $region29
    $region28: #{_mlp2_forward_impl.1} parent=1 // pred_region
      %52 = dma.done [#allocation7], 2048
    $region29: #{_mlp2_forward_impl.1} parent=1 // pred_fallthru
      _
    %p53 = scmp.eq.s32.totalorder 0, 0
    // Predicated region
    $region30: #{_mlp2_forward_impl.1} parent=1 // pred_check
      %p54 = pneg %p53
    $region31: #{_mlp2_forward_impl.1} parent=1 // pred_check_branch
      %56 = sbr.rel (%p54) target = $region33
    $region32: #{_mlp2_forward_impl.1} parent=1 // pred_region
      %57 = vst [vmem:[#allocation2] sm:$0xff] 0.0
    $region33: #{_mlp2_forward_impl.1} parent=1 // pred_fallthru
      _
    %v58 = vld [vmem:[%s0] sm:$0xff]
    %v59 = vld [vmem:[#allocation3] sm:$0xff]
    %v60 = vld [vmem:[#allocation3 + $0x8] sm:$0xff]
    %v61 = vld [vmem:[#allocation3 + $0x10] sm:$0xff]
    %v62 = vld [vmem:[#allocation3 + $0x18] sm:$0xff]
    %v63 = vld [vmem:[#allocation3 + $0x20] sm:$0xff]
    %v64 = vld [vmem:[#allocation3 + $0x28] sm:$0xff]
    %v65 = vld [vmem:[#allocation3 + $0x30] sm:$0xff]
    %v66 = vld [vmem:[#allocation3 + $0x38] sm:$0xff]
    %v67 = vld [vmem:[#allocation3 + $0x40] sm:$0xff]
    %v68 = vld [vmem:[#allocation3 + $0x48] sm:$0xff]
    %v69 = vld [vmem:[#allocation3 + $0x50] sm:$0xff]
    %v70 = vld [vmem:[#allocation3 + $0x58] sm:$0xff]
    %v71 = vld [vmem:[#allocation3 + $0x60] sm:$0xff]
    %v72 = vld [vmem:[#allocation3 + $0x68] sm:$0xff]
    %v73 = vld [vmem:[#allocation3 + $0x70] sm:$0xff]
    %v74 = vld [vmem:[#allocation3 + $0x78] sm:$0xff]
    %v75 = vld [vmem:[%s2] sm:$0x1]
    %v77 = vperm.slane %v75, 0
    %79 = vmatpush.msra.mxu0 %v74
    %80 = vmatpush.msra.mxu0 %v73
    %81 = vmatpush.msra.mxu0 %v72
    %82 = vmatpush.msra.mxu0 %v71
    %83 = vmatpush.msra.mxu0 %v70
    %84 = vmatpush.msra.mxu0 %v69
    %85 = vmatpush.msra.mxu0 %v68
    %86 = vmatpush.msra.mxu0 %v67
    %87 = vmatpush.msra.mxu0 %v66
    %88 = vmatpush.msra.mxu0 %v65
    %89 = vmatpush.msra.mxu0 %v64
    %90 = vmatpush.msra.mxu0 %v63
    %91 = vmatpush.msra.mxu0 %v62
    %92 = vmatpush.msra.mxu0 %v61
    %93 = vmatpush.msra.mxu0 %v60
    %94 = vmatpush.msra.mxu0 %v59
    %95 = vmatmul.f32.gmra.mxu0 %v58
    %v96 = vpop.f32.mrf.mxu0
    %v97 = vadd.f32 %v77, %v96
    %98 = vdwg.mxu0
    %v99 = vmax.f32 %v97, 0.0
    %v100 = vld [vmem:[#allocation2] sm:$0xff]
    %v101 = vld [vmem:[#allocation6] sm:$0xff]
    %v102 = vld [vmem:[#allocation6 + $0x8] sm:$0xff]
    %v103 = vld [vmem:[#allocation6 + $0x10] sm:$0xff]
    %v104 = vld [vmem:[#allocation6 + $0x18] sm:$0xff]
    %v105 = vld [vmem:[#allocation6 + $0x20] sm:$0xff]
    %v106 = vld [vmem:[#allocation6 + $0x28] sm:$0xff]
    %v107 = vld [vmem:[#allocation6 + $0x30] sm:$0xff]
    %v108 = vld [vmem:[#allocation6 + $0x38] sm:$0xff]
    %v109 = vld [vmem:[#allocation6 + $0x40] sm:$0xff]
    %v110 = vld [vmem:[#allocation6 + $0x48] sm:$0xff]
    %v111 = vld [vmem:[#allocation6 + $0x50] sm:$0xff]
    %v112 = vld [vmem:[#allocation6 + $0x58] sm:$0xff]
    %v113 = vld [vmem:[#allocation6 + $0x60] sm:$0xff]
    %v114 = vld [vmem:[#allocation6 + $0x68] sm:$0xff]
    %v115 = vld [vmem:[#allocation6 + $0x70] sm:$0xff]
    %v116 = vld [vmem:[#allocation6 + $0x78] sm:$0xff]
    %117 = vmatpush.msra.mxu0 %v116
    %118 = vmatpush.msra.mxu0 %v115
    %119 = vmatpush.msra.mxu0 %v114
    %120 = vmatpush.msra.mxu0 %v113
    %121 = vmatpush.msra.mxu0 %v112
    %122 = vmatpush.msra.mxu0 %v111
    %123 = vmatpush.msra.mxu0 %v110
    %124 = vmatpush.msra.mxu0 %v109
    %125 = vmatpush.msra.mxu0 %v108
    %126 = vmatpush.msra.mxu0 %v107
    %127 = vmatpush.msra.mxu0 %v106
    %128 = vmatpush.msra.mxu0 %v105
    %129 = vmatpush.msra.mxu0 %v104
    %130 = vmatpush.msra.mxu0 %v103
    %131 = vmatpush.msra.mxu0 %v102
    %132 = vmatpush.msra.mxu0 %v101
    %133 = vmatmul.f32.gmra.mxu0 %v99
    %v134 = vpop.f32.mrf.mxu0
    %v135 = vadd.f32 0.0, %v134
    %136 = vdwg.mxu0
    %v137 = vadd.f32 %v100, %v135
    %138 = vst [vmem:[#allocation2] sm:$0xff] %v137
    // Predicated region
    $region34: #{_mlp2_forward_impl.1} parent=1 // pred_check
      %p139 = pneg %p53
    $region35: #{_mlp2_forward_impl.1} parent=1 // pred_check_branch
      %141 = sbr.rel (%p139) target = $region37
    $region36: #{_mlp2_forward_impl.1} parent=1 // pred_region
      %v142 = vld [vmem:[#allocation2] sm:$0xff]
      %v143 = vld [vmem:[%s4] sm:$0x1]
      %v145 = vperm.slane %v143, 0
      %v147 = vadd.f32 %v142, %v145
      %v148 = vmax.f32 %v147, 0.0
      %149 = vst [vmem:[#allocation8] sm:$0xff] %v148
    $region37: #{_mlp2_forward_impl.1} parent=1 // pred_fallthru
      _
    // Predicated region
    $region38: #{_mlp2_forward_impl.1} parent=1 // pred_check
      _
    $region39: #{_mlp2_forward_impl.1} parent=1 // pred_check_branch
      %151 = sbr.rel (0) target = $region41
    $region40: #{_mlp2_forward_impl.1} parent=1 // pred_region
      %153 = vsyncadd [#allocation5], 0
      %s155 = sshll.u32 [#allocation8], 4
      %s156 = int_to_ptr.vmem [resolvable:$true] %s155
      %s157 = sshll.u32 %s5, 4
      %s158 = int_to_ptr.hbm [resolvable:$true] %s157
      %160 = dma.vmem_to_hbm [thread:$0]  %s156, 128, %s158, [#allocation5]
    $region41: #{_mlp2_forward_impl.1} parent=1 // pred_fallthru
      _
    // Predicated region
    $region42: #{_mlp2_forward_impl.1} parent=1 // pred_check
      _
    $region43: #{_mlp2_forward_impl.1} parent=1 // pred_check_branch
      %162 = sbr.rel (0) target = $region45
    $region44: #{_mlp2_forward_impl.1} parent=1 // pred_region
      %164 = dma.done [#allocation5], 128
    $region45: #{_mlp2_forward_impl.1} parent=1 // pred_fallthru
      _
    %165 = vsyncpa [#allocation4], 1
    %166 = vsyncpa [#allocation7], 1
    %167 = vsyncpa [#allocation5], 1

</llo_original>
